<compile_context>
chip_gen: v5e
topology: v5e:2x2
jax: 0.10.0
libtpu: 0.0.40
codegen_flags: <defaults>
</compile_context>

<pallas_src>
import jax
import jax.numpy as jnp
from jax import lax
from jax.experimental import pallas as pl
from jax.experimental.pallas import tpu as pltpu


def _make_kernel(baseline_type, num_metrics):
    M = num_metrics

    def kernel(pred_ref, feat_ref, e_ref, out_ref):
        # pred_ref: VMEM (TB, 1) int32, feat_ref: VMEM (TB, F) f32,
        # e_ref: VMEM (F, M) f32 (constant scatter matrix), out_ref: VMEM (TB, M) f32
        n = pred_ref[...]                                   # (TB, 1) int32
        feats = feat_ref[...]                               # (TB, F) f32
        F = feats.shape[1]

        col = lax.broadcasted_iota(jnp.int32, (1, F), 1)    # (1, F), built once
        hi = n * M                                          # (TB, 1)
        if baseline_type == "last":
            mask = (col >= (hi - M)) & (col < hi)           # one utterance window
        else:
            mask = col < hi                                 # prefix window

        masked = jnp.where(mask, feats, 0.0)                # (TB, F)
        # Per-metric group sum via MXU: (TB, F) @ (F, M) -> (TB, M)
        s = jnp.dot(masked, e_ref[...], preferred_element_type=jnp.float32)

        if baseline_type == "mean":
            out_ref[...] = s / n.astype(jnp.float32)
        else:
            out_ref[...] = s

    return kernel


def baseline_forward(numerical_features, prediction_positions,
                     num_metrics=1, baseline_type="mean"):
    """numerical_features: (B, U*num_metrics) float; prediction_positions: (B,) int."""
    B, F = numerical_features.shape
    assert F % num_metrics == 0
    U = F // num_metrics

    feats = numerical_features.astype(jnp.float32)
    preds = prediction_positions.astype(jnp.int32).reshape(B, 1)

    # Batch-tile sizing: keep each (TB, F) input buffer around ~4 MiB so the
    # double-buffered pipeline stays well inside scoped VMEM on v5e/v6e/v7x.
    bytes_per_row = max(F * 4, 1)
    tb_cap = max(8, ((4 * 1024 * 1024) // bytes_per_row) // 8 * 8)
    if B <= tb_cap:
        TB, B_pad = B, B
    else:
        TB = tb_cap
        B_pad = -(-B // TB) * TB

    if B_pad != B:
        feats = jnp.pad(feats, ((0, B_pad - B), (0, 0)))
        # pad preds with 1 so the padded rows stay finite (they are sliced off).
        preds = jnp.pad(preds, ((0, B_pad - B), (0, 0)), constant_values=1)

    # Constant block-identity scatter matrix: E[u*M + m, m] = 1.
    e_mat = jnp.tile(jnp.eye(num_metrics, dtype=jnp.float32), (U, 1))  # (F, M)

    kernel = _make_kernel(baseline_type, num_metrics)

    out = pl.pallas_call(
        kernel,
        out_shape=jax.ShapeDtypeStruct((B_pad, num_metrics), jnp.float32),
        grid_spec=pltpu.PrefetchScalarGridSpec(
            num_scalar_prefetch=0,
            grid=(B_pad // TB,),
            in_specs=[
                pl.BlockSpec((TB, 1), lambda i: (i, 0)),                 # preds
                pl.BlockSpec((TB, F), lambda i: (i, 0)),                 # features
                pl.BlockSpec((F, num_metrics), lambda i: (0, 0)),        # scatter E
            ],
            out_specs=pl.BlockSpec((TB, num_metrics), lambda i: (i, 0)),
        ),
        compiler_params=pltpu.CompilerParams(
            dimension_semantics=("parallel",)),
    )(preds, feats, e_mat)

    return out[:B]


# ----------------------------- pure-JAX references -----------------------------

def _ref_mean(feats_flat, preds, M):
    outs = []
    for idx in range(feats_flat.shape[0]):
        last = int(preds[idx]) * M
        outs.append(jnp.mean(feats_flat[idx, :last].reshape(-1, M), axis=0))
    return jnp.stack(outs)


def _ref_last(feats_flat, preds, M):
    outs = []
    for idx in range(feats_flat.shape[0]):
        last = int(preds[idx]) * M
        first = (int(preds[idx]) - 1) * M
        outs.append(feats_flat[idx, first:last])
    return jnp.stack(outs)


if __name__ == "__main__":
    key = jax.random.PRNGKey(0)
    B, U, M = 2, 8, 4          # batch=2, max 8 utterances, 4 metrics
    k_feat, _ = jax.random.split(key)

    numerical_features = jax.random.normal(k_feat, (B, U * M), dtype=jnp.float32)
    prediction_positions = jnp.array([5, 8], dtype=jnp.int32)  # 1 <= p <= U

    # baseline_type='mean' (module default)
    out_mean = jax.block_until_ready(
        baseline_forward(numerical_features, prediction_positions,
                         num_metrics=M, baseline_type="mean"))
    ref_mean = _ref_mean(numerical_features, prediction_positions, M)
    assert out_mean.shape == (B, M)
    assert jnp.allclose(out_mean, ref_mean, atol=1e-5, rtol=1e-5)

    # baseline_type='last'
    out_last = jax.block_until_ready(
        baseline_forward(numerical_features, prediction_positions,
                         num_metrics=M, baseline_type="last"))
    ref_last = _ref_last(numerical_features, prediction_positions, M)
    assert out_last.shape == (B, M)
    assert jnp.allclose(out_last, ref_last, atol=1e-5, rtol=1e-5)

    print("KERNEL_OK")
</pallas_src>

<mosaic_0001>
module attributes {stable_mosaic.version = 11 : i64} {
  func.func @kernel(%arg0: i32, %arg1: memref<2x1xi32, #tpu.memory_space<vmem>>, %arg2: memref<2x32xf32, #tpu.memory_space<vmem>>, %arg3: memref<32x4xf32, #tpu.memory_space<vmem>>, %arg4: memref<2x4xf32, #tpu.memory_space<vmem>>) attributes {dimension_semantics = [#tpu.dimension_semantics<parallel>], iteration_bounds = array<i64: 1>, scalar_prefetch = 0 : i64, scratch_operands = 0 : i64, tpu.core_type = #tpu.core_type<tc>, window_params = [{transform_indices = @transform_0, window_bounds = array<i64: 2, 1>}, {transform_indices = @transform_1, window_bounds = array<i64: 2, 32>}, {pipeline_mode = #tpu.pipeline_mode<synchronous>, transform_indices = @transform_2, window_bounds = array<i64: 32, 4>}, {transform_indices = @transform_3, window_bounds = array<i64: 2, 4>}]} {
    %c0 = arith.constant 0 : index
    %c0_0 = arith.constant 0 : index
    %0 = vector.load %arg1[%c0, %c0_0] : memref<2x1xi32, #tpu.memory_space<vmem>>, vector<2x1xi32>
    %c0_1 = arith.constant 0 : index
    %c0_2 = arith.constant 0 : index
    %1 = vector.load %arg2[%c0_1, %c0_2] : memref<2x32xf32, #tpu.memory_space<vmem>>, vector<2x32xf32>
    %2 = tpu.iota {dimensions = array<i32: 1>} : vector<1x32xi32>
    %c4_i32 = arith.constant 4 : i32
    %3 = vector.broadcast %c4_i32 : i32 to vector<2x1xi32>
    %4 = arith.muli %0, %3 : vector<2x1xi32>
    %5 = vector.broadcast %2 : vector<1x32xi32> to vector<2x32xi32>
    %6 = vector.broadcast %4 : vector<2x1xi32> to vector<2x32xi32>
    %7 = arith.cmpi slt, %5, %6 : vector<2x32xi32>
    %cst = arith.constant 0.000000e+00 : f32
    %8 = vector.broadcast %cst : f32 to vector<2x32xf32>
    %9 = arith.select %7, %1, %8 : vector<2x32xi1>, vector<2x32xf32>
    %c0_3 = arith.constant 0 : index
    %c0_4 = arith.constant 0 : index
    %10 = vector.load %arg3[%c0_3, %c0_4] : memref<32x4xf32, #tpu.memory_space<vmem>>, vector<32x4xf32>
    %cst_5 = arith.constant dense<0.000000e+00> : vector<2x4xf32>
    %11 = tpu.matmul %9, %10, %cst_5 {dimension_numbers = #tpu.dot_dimension_numbers<[1], [0], [0], [1], [0, 0, 1, 1], [], []>} : vector<2x32xf32>, vector<32x4xf32>, vector<2x4xf32> -> vector<2x4xf32>
    %12 = arith.sitofp %0 : vector<2x1xi32> to vector<2x1xf32>
    %13 = vector.broadcast %12 : vector<2x1xf32> to vector<2x4xf32>
    %14 = arith.divf %11, %13 : vector<2x4xf32>
    %c0_6 = arith.constant 0 : index
    %c0_7 = arith.constant 0 : index
    %15 = vector.load %arg4[%c0_6, %c0_7] : memref<2x4xf32, #tpu.memory_space<vmem>>, vector<2x4xf32>
    tpu.vector_store %arg4[%c0_6, %c0_7], %14 {strides = array<i32>} : memref<2x4xf32, #tpu.memory_space<vmem>>, vector<2x4xf32>,
    return
  }
  func.func @transform_0(%arg0: i32) -> (i32, i32) {
    %c0_i32 = arith.constant 0 : i32
    %c0_i32_0 = arith.constant 0 : i32
    return %arg0, %c0_i32 : i32, i32
  }
  func.func @transform_1(%arg0: i32) -> (i32, i32) {
    %c0_i32 = arith.constant 0 : i32
    %c0_i32_0 = arith.constant 0 : i32
    return %arg0, %c0_i32 : i32, i32
  }
  func.func @transform_2(%arg0: i32) -> (i32, i32) {
    %c0_i32 = arith.constant 0 : i32
    %c0_i32_0 = arith.constant 0 : i32
    %c0_i32_1 = arith.constant 0 : i32
    return %c0_i32, %c0_i32_0 : i32, i32
  }
  func.func @transform_3(%arg0: i32) -> (i32, i32) {
    %c0_i32 = arith.constant 0 : i32
    %c0_i32_0 = arith.constant 0 : i32
    return %arg0, %c0_i32 : i32, i32
  }
}

</mosaic_0001>

<llo_original>
// kernel: tpu_custom_call.1
$region0: #{tpu_custom_call.1}
  #allocation0 [shape = 'u32[]', space=smem, size = 0x4, offset = 0x4, fixed_abs, tag = 'smem constant byte address 0x4 - core index']
  #allocation1 [shape = 'u32[72,128]{1,0:T(1,128)}', space=vmem, size = 0x9000, scoped, tag = 'internal scratch']
  %s0 = inlined_call_operand.vmem [shape: s32[2,1], index: 0, kind: input, shape index: {}]
  %s1 = inlined_call_operand.vmem [shape: f32[2,32], index: 1, kind: input, shape index: {}]
  %s2 = inlined_call_operand.vmem [shape: f32[32,4], index: 2, kind: input, shape index: {}]
  %s3 = inlined_call_operand.hbm [shape: f32[2,4], index: 3, kind: output, shape index: {}]
  %s4 = sld [smem:[#allocation0]]
  $region22: #{tpu_custom_call.1} parent=0
    _
  %s6 = ssub.s32 1, %s4
  %s7 = scalar_select 0, %s6, %s4
  $region1: #{tpu_custom_call.1} parent=0
    #allocation2 [shape = 'u8[1024]{0}', space=vmem, size = 0x400, scoped, tag = 'output window, operand 0, single buffered']
    #allocation3 [shape = 's32[1]{0}', space=sflag, size = 0x4, scoped, tag = 'scoped memory for tpu_custom_call.1']
    %8 = vsyncpa [#allocation3], 0
    // Predicated region
    $region2: #{tpu_custom_call.1} parent=1 // pred_check
      _
    $region3: #{tpu_custom_call.1} parent=1 // pred_check_branch
      %10 = sbr.rel (0) target = $region5
    $region4: #{tpu_custom_call.1} parent=1 // pred_region
      _
    $region5: #{tpu_custom_call.1} parent=1 // pred_fallthru
      _
    // Predicated region
    $region6: #{tpu_custom_call.1} parent=1 // pred_check
      _
    $region7: #{tpu_custom_call.1} parent=1 // pred_check_branch
      %12 = sbr.rel (0) target = $region9
    $region8: #{tpu_custom_call.1} parent=1 // pred_region
      _
    $region9: #{tpu_custom_call.1} parent=1 // pred_fallthru
      _
    // Predicated region
    $region10: #{tpu_custom_call.1} parent=1 // pred_check
      _
    $region11: #{tpu_custom_call.1} parent=1 // pred_check_branch
      %14 = sbr.rel (0) target = $region13
    $region12: #{tpu_custom_call.1} parent=1 // pred_region
      _
    $region13: #{tpu_custom_call.1} parent=1 // pred_fallthru
      _
    %v15 = vld [vmem:[%s0] sm:$0x3]
    %v16 = vld [vmem:[%s1] sm:$0x3]
    %v17 = vlaneseq
    %v18 = vand.u32 %v17, 127
    %v19 = vmul.u32 %v15, 4
    %20 = vset.pattern.permute.xlu0 0
    %21 = vperm.xlu0 %20, %v19
    %v22 = vpop.permute.xlu0 %21
    %vm23 = vcmp.lt.s32.totalorder %v18, %v22
    %v24 = vsel %vm23, %v16, 0.0
    %v25 = vld [vmem:[%s2] sm:$0xff]
    %v26 = vld [vmem:[%s2 + $0x8] sm:$0xff]
    %v27 = vld [vmem:[%s2 + $0x10] sm:$0xff]
    %v28 = vld [vmem:[%s2 + $0x18] sm:$0xff]
    %vm29 = vcmask 261120
    %v31 = vsel %vm29, %v24, 0
    %33 = vmatpush.msra.mxu0 0.0
    %34 = vmatpush.msra.mxu0 0.0
    %35 = vmatpush.msra.mxu0 0.0
    %36 = vmatpush.msra.mxu0 0.0
    %37 = vmatpush.msra.mxu0 0.0
    %38 = vmatpush.msra.mxu0 0.0
    %39 = vmatpush.msra.mxu0 0.0
    %40 = vmatpush.msra.mxu0 0.0
    %41 = vmatpush.msra.mxu0 0.0
    %42 = vmatpush.msra.mxu0 0.0
    %43 = vmatpush.msra.mxu0 0.0
    %44 = vmatpush.msra.mxu0 0.0
    %45 = vmatpush.msra.mxu0 %v28
    %46 = vmatpush.msra.mxu0 %v27
    %47 = vmatpush.msra.mxu0 %v26
    %48 = vmatpush.msra.mxu0 %v25
    %49 = vmatmul.f32.gmra.mxu0 %v31
    %v50 = vpop.f32.mrf.mxu0
    %v51 = vadd.f32 0.0, %v50
    %52 = vdwg.mxu0
    %v53 = vcvt.s32.f32 %v15
    %55 = vset.pattern.permute.xlu0 0
    %56 = vperm.xlu0 %55, %v53
    %v57 = vpop.permute.xlu0 %56
    %v59 = vrcp.pop %v57
    %v60 = vmul.f32 %v57, %v59
    %v61 = vsub.f32 1.0, %v60
    %v62 = vmul.f32 %v59, %v61
    %v63 = vadd.f32 %v59, %v62
    %vm64 = vweird.f32 %v57
    %vm65 = vweird.f32 %v59
    %vm66 = vmor %vm64, %vm65
    %v67 = vsel %vm66, %v59, %v63
    %v68 = vand.u32 2147483647, %v57
    %vm69 = vcmp.eq.f32.partialorder %v68, 8.507059e+37
    %v70 = vand.u32 %v57, 2147483648
    %v71 = vor.u32 1.1754944e-38, %v70
    %v72 = vsel %vm69, %v71, %v67
    %v73 = vmul.f32 %v51, %v72
    %vm74 = vcmask 25600
    %75 = vst.msk [vmem:[#allocation2] sm:$0x3] %vm74, %v73
    // Predicated region
    $region14: #{tpu_custom_call.1} parent=1 // pred_check
      _
    $region15: #{tpu_custom_call.1} parent=1 // pred_check_branch
      %77 = sbr.rel (0) target = $region17
    $region16: #{tpu_custom_call.1} parent=1 // pred_region
      %79 = vsyncadd [#allocation3], 0
      %s81 = sshll.u32 [#allocation2], 4
      %s82 = int_to_ptr.vmem [resolvable:$true] %s81
      %s83 = sshll.u32 %s3, 4
      %s84 = int_to_ptr.hbm [resolvable:$true] %s83
      %86 = dma.vmem_to_hbm [thread:$0]  %s82, 32, %s84, [#allocation3]
    $region17: #{tpu_custom_call.1} parent=1 // pred_fallthru
      _
    // Predicated region
    $region18: #{tpu_custom_call.1} parent=1 // pred_check
      _
    $region19: #{tpu_custom_call.1} parent=1 // pred_check_branch
      %88 = sbr.rel (0) target = $region21
    $region20: #{tpu_custom_call.1} parent=1 // pred_region
      %90 = dma.done [#allocation3], 32
    $region21: #{tpu_custom_call.1} parent=1 // pred_fallthru
      _
    %91 = vsyncpa [#allocation3], 1

</llo_original>
